<compile_context>
chip_gen: v7x
topology: tpu7x:2x2x1
jax: 0.10.0
libtpu: 0.0.40
codegen_flags: <defaults>
</compile_context>

<pallas_src>
import jax
import jax.numpy as jnp
import numpy as np
from jax import lax
from jax.experimental import pallas as pl
from jax.experimental.pallas import tpu as pltpu

# --- module hyper-params (derived from the PyTorch script) ---------------
input_str = 'apple'
label_str = 'pple!'
char_vocab = sorted(list(set(input_str + label_str)))   # ['!', 'a', 'e', 'l', 'p']
vocab_size = len(char_vocab)                            # 5
input_size = vocab_size                                 # 5
hidden_size = 5
output_size = 5


def rnn_fc_kernel(x_ref, wih_ref, whh_ref, b_ref, wfc_ref, bfc_ref,
                  o_ref, ts_ref):
    """Single-invocation RNN + Linear forward.

    Refs (all whole-array, VMEM resident):
      x_ref   : (B, T, D_in)   batch-first input
      wih_ref : (D_in, H)      W_ih^T
      whh_ref : (H, H)         W_hh^T
      b_ref   : (1, H)         b_ih + b_hh (fused)
      wfc_ref : (H, D_out)     W_fc^T
      bfc_ref : (1, D_out)     b_fc
      o_ref   : (B, T, D_out)  batch-first output
      ts_ref  : (T, B, H)      scratch: first x-projection, then hidden states
    """
    B, T, _ = x_ref.shape
    H = whh_ref.shape[0]
    D_out = wfc_ref.shape[1]

    wih = wih_ref[...]
    whh = whh_ref[...]
    wfc = wfc_ref[...]

    # Hoisted bias broadcasts (done once, not per loop iteration).
    b_rows = jnp.broadcast_to(b_ref[...], (T, H))          # (T, H)
    bfc_rows = jnp.broadcast_to(bfc_ref[...], (T, D_out))  # (T, D_out)

    # (1) Hoisted input projection for ALL timesteps: one (T,D_in)x(D_in,H)
    #     MXU push per batch element, RNN bias folded in here.
    for bi in range(B):  # B static & tiny -> unrolled at trace time
        ts_ref[:, bi, :] = (
            jnp.dot(x_ref[bi], wih, preferred_element_type=jnp.float32)
            + b_rows)

    # (2) Elman recurrence. Only h @ W_hh^T and tanh remain inside the loop;
    #     T is static so the chain is fully unrolled straight-line code.
    #     ts_ref[t] is read (x-projection) then overwritten in place with h_t.
    h = jnp.zeros((B, H), jnp.float32)  # h_0 = 0 (PyTorch default)
    for t in range(T):
        h = jnp.tanh(ts_ref[t]
                     + jnp.dot(h, whh, preferred_element_type=jnp.float32))
        ts_ref[t] = h

    # (3) Batched output projection: one (T,H)x(H,D_out) MXU push per batch
    #     element, one slab store per batch element.
    for bi in range(B):
        o_ref[bi] = (
            jnp.dot(ts_ref[:, bi, :], wfc, preferred_element_type=jnp.float32)
            + bfc_rows).astype(o_ref.dtype)


def net_forward(x, params):
    """x: (B, T, input_size) float32, batch_first like the PyTorch module."""
    w_ih, w_hh, b_ih, b_hh, w_fc, b_fc = params
    B, T, D_in = x.shape
    H = w_hh.shape[0]
    D_out = w_fc.shape[0]

    # Tiny glue on the 5x5 weights only (no activation transposes).
    wih_t = w_ih.T                        # (D_in, H)
    whh_t = w_hh.T                        # (H, H)
    b_rnn = (b_ih + b_hh).reshape(1, H)   # (1, H)
    wfc_t = w_fc.T                        # (H, D_out)
    bfc = b_fc.reshape(1, D_out)          # (1, D_out)

    vmem_spec = lambda: pl.BlockSpec(memory_space=pltpu.MemorySpace.VMEM)

    return pl.pallas_call(
        rnn_fc_kernel,
        out_shape=jax.ShapeDtypeStruct((B, T, D_out), x.dtype),
        in_specs=[vmem_spec() for _ in range(6)],
        out_specs=vmem_spec(),
        scratch_shapes=[pltpu.VMEM((T, B, H), jnp.float32)],
    )(x, wih_t, whh_t, b_rnn, wfc_t, bfc)


def reference_forward(x, params):
    """Pure-JAX reference matching torch.nn.RNN(batch_first=True) + Linear."""
    w_ih, w_hh, b_ih, b_hh, w_fc, b_fc = params
    B = x.shape[0]
    H = w_hh.shape[0]

    def step(h, x_t):
        h_new = jnp.tanh(x_t @ w_ih.T + b_ih + h @ w_hh.T + b_hh)
        return h_new, h_new

    x_tm = jnp.transpose(x, (1, 0, 2))
    _, hs = lax.scan(step, jnp.zeros((B, H), x.dtype), x_tm)
    hs = jnp.transpose(hs, (1, 0, 2))                  # (B, T, H)
    return hs @ w_fc.T + b_fc


def init_params(key):
    """Deterministic init mimicking PyTorch default U(-1/sqrt(H), 1/sqrt(H))."""
    k = 1.0 / np.sqrt(hidden_size)
    keys = jax.random.split(key, 6)
    w_ih = jax.random.uniform(keys[0], (hidden_size, input_size), jnp.float32, -k, k)
    w_hh = jax.random.uniform(keys[1], (hidden_size, hidden_size), jnp.float32, -k, k)
    b_ih = jax.random.uniform(keys[2], (hidden_size,), jnp.float32, -k, k)
    b_hh = jax.random.uniform(keys[3], (hidden_size,), jnp.float32, -k, k)
    w_fc = jax.random.uniform(keys[4], (output_size, hidden_size), jnp.float32, -k, k)
    b_fc = jax.random.uniform(keys[5], (output_size,), jnp.float32, -k, k)
    return (w_ih, w_hh, b_ih, b_hh, w_fc, b_fc)


if __name__ == "__main__":
    key = jax.random.PRNGKey(0)
    pkey, xkey = jax.random.split(key)
    params = init_params(pkey)

    B, T = 2, 8
    x = jax.random.normal(xkey, (B, T, input_size), jnp.float32)

    out = jax.block_until_ready(net_forward(x, params))
    ref = jax.block_until_ready(reference_forward(x, params))

    assert out.shape == (B, T, output_size), out.shape
    np.testing.assert_allclose(np.asarray(out), np.asarray(ref), atol=1e-5, rtol=1e-5)

    print("KERNEL_OK")
</pallas_src>

<mosaic_0001>
module attributes {stable_mosaic.version = 11 : i64} {
  func.func @rnn_fc_kernel(%arg0: memref<2x8x5xf32, #tpu.memory_space<vmem>>, %arg1: memref<5x5xf32, #tpu.memory_space<vmem>>, %arg2: memref<5x5xf32, #tpu.memory_space<vmem>>, %arg3: memref<1x5xf32, #tpu.memory_space<vmem>>, %arg4: memref<5x5xf32, #tpu.memory_space<vmem>>, %arg5: memref<1x5xf32, #tpu.memory_space<vmem>>, %arg6: memref<2x8x5xf32, #tpu.memory_space<vmem>>, %arg7: memref<8x2x5xf32, #tpu.memory_space<vmem>>) attributes {dimension_semantics = [], scalar_prefetch = 0 : i64, scratch_operands = 1 : i64, tpu.core_type = #tpu.core_type<tc>} {
    %c0 = arith.constant 0 : index
    %c0_0 = arith.constant 0 : index
    %0 = vector.load %arg1[%c0, %c0_0] : memref<5x5xf32, #tpu.memory_space<vmem>>, vector<5x5xf32>
    %c0_1 = arith.constant 0 : index
    %c0_2 = arith.constant 0 : index
    %1 = vector.load %arg2[%c0_1, %c0_2] : memref<5x5xf32, #tpu.memory_space<vmem>>, vector<5x5xf32>
    %c0_3 = arith.constant 0 : index
    %c0_4 = arith.constant 0 : index
    %2 = vector.load %arg4[%c0_3, %c0_4] : memref<5x5xf32, #tpu.memory_space<vmem>>, vector<5x5xf32>
    %c0_5 = arith.constant 0 : index
    %c0_6 = arith.constant 0 : index
    %3 = vector.load %arg3[%c0_5, %c0_6] : memref<1x5xf32, #tpu.memory_space<vmem>>, vector<1x5xf32>
    %4 = vector.shape_cast %3 : vector<1x5xf32> to vector<1x5xf32>
    %5 = vector.broadcast %4 : vector<1x5xf32> to vector<8x5xf32>
    %c0_7 = arith.constant 0 : index
    %c0_8 = arith.constant 0 : index
    %6 = vector.load %arg5[%c0_7, %c0_8] : memref<1x5xf32, #tpu.memory_space<vmem>>, vector<1x5xf32>
    %7 = vector.shape_cast %6 : vector<1x5xf32> to vector<1x5xf32>
    %8 = vector.broadcast %7 : vector<1x5xf32> to vector<8x5xf32>
    %c0_9 = arith.constant 0 : index
    %c0_10 = arith.constant 0 : index
    %c0_11 = arith.constant 0 : index
    %9 = vector.load %arg0[%c0_9, %c0_10, %c0_11] : memref<2x8x5xf32, #tpu.memory_space<vmem>>, vector<1x8x5xf32>
    %10 = vector.shape_cast %9 : vector<1x8x5xf32> to vector<8x5xf32>
    %cst = arith.constant dense<0.000000e+00> : vector<8x5xf32>
    %11 = tpu.matmul %10, %0, %cst {dimension_numbers = #tpu.dot_dimension_numbers<[1], [0], [0], [1], [0, 0, 1, 1], [], []>} : vector<8x5xf32>, vector<5x5xf32>, vector<8x5xf32> -> vector<8x5xf32>
    %12 = arith.addf %11, %5 : vector<8x5xf32>
    %c0_12 = arith.constant 0 : index
    %c0_13 = arith.constant 0 : index
    %c0_14 = arith.constant 0 : index
    %13 = vector.load %arg7[%c0_12, %c0_13, %c0_14] : memref<8x2x5xf32, #tpu.memory_space<vmem>>, vector<8x1x5xf32>
    %14 = vector.shape_cast %13 : vector<8x1x5xf32> to vector<8x5xf32>
    %15 = vector.shape_cast %12 : vector<8x5xf32> to vector<8x1x5xf32>
    tpu.vector_store %arg7[%c0_12, %c0_13, %c0_14], %15 {strides = array<i32>} : memref<8x2x5xf32, #tpu.memory_space<vmem>>, vector<8x1x5xf32>,
    %c1 = arith.constant 1 : index
    %c0_15 = arith.constant 0 : index
    %c0_16 = arith.constant 0 : index
    %16 = vector.load %arg0[%c1, %c0_15, %c0_16] : memref<2x8x5xf32, #tpu.memory_space<vmem>>, vector<1x8x5xf32>
    %17 = vector.shape_cast %16 : vector<1x8x5xf32> to vector<8x5xf32>
    %cst_17 = arith.constant dense<0.000000e+00> : vector<8x5xf32>
    %18 = tpu.matmul %17, %0, %cst_17 {dimension_numbers = #tpu.dot_dimension_numbers<[1], [0], [0], [1], [0, 0, 1, 1], [], []>} : vector<8x5xf32>, vector<5x5xf32>, vector<8x5xf32> -> vector<8x5xf32>
    %19 = arith.addf %18, %5 : vector<8x5xf32>
    %c0_18 = arith.constant 0 : index
    %c1_19 = arith.constant 1 : index
    %c0_20 = arith.constant 0 : index
    %20 = vector.load %arg7[%c0_18, %c1_19, %c0_20] : memref<8x2x5xf32, #tpu.memory_space<vmem>>, vector<8x1x5xf32>
    %21 = vector.shape_cast %20 : vector<8x1x5xf32> to vector<8x5xf32>
    %22 = vector.shape_cast %19 : vector<8x5xf32> to vector<8x1x5xf32>
    tpu.vector_store %arg7[%c0_18, %c1_19, %c0_20], %22 {strides = array<i32>} : memref<8x2x5xf32, #tpu.memory_space<vmem>>, vector<8x1x5xf32>,
    %cst_21 = arith.constant 0.000000e+00 : f32
    %23 = vector.broadcast %cst_21 : f32 to vector<2x5xf32>
    %c0_22 = arith.constant 0 : index
    %c0_23 = arith.constant 0 : index
    %c0_24 = arith.constant 0 : index
    %24 = vector.load %arg7[%c0_22, %c0_23, %c0_24] : memref<8x2x5xf32, #tpu.memory_space<vmem>>, vector<1x2x5xf32>
    %25 = vector.shape_cast %24 : vector<1x2x5xf32> to vector<2x5xf32>
    %cst_25 = arith.constant dense<0.000000e+00> : vector<2x5xf32>
    %26 = tpu.matmul %23, %1, %cst_25 {dimension_numbers = #tpu.dot_dimension_numbers<[1], [0], [0], [1], [0, 0, 1, 1], [], []>} : vector<2x5xf32>, vector<5x5xf32>, vector<2x5xf32> -> vector<2x5xf32>
    %27 = arith.addf %25, %26 : vector<2x5xf32>
    %28 = math.tanh %27 : vector<2x5xf32>
    %c0_26 = arith.constant 0 : index
    %c0_27 = arith.constant 0 : index
    %c0_28 = arith.constant 0 : index
    %29 = vector.load %arg7[%c0_26, %c0_27, %c0_28] : memref<8x2x5xf32, #tpu.memory_space<vmem>>, vector<1x2x5xf32>
    %30 = vector.shape_cast %29 : vector<1x2x5xf32> to vector<2x5xf32>
    %31 = vector.shape_cast %28 : vector<2x5xf32> to vector<1x2x5xf32>
    tpu.vector_store %arg7[%c0_26, %c0_27, %c0_28], %31 {strides = array<i32>} : memref<8x2x5xf32, #tpu.memory_space<vmem>>, vector<1x2x5xf32>,
    %c1_29 = arith.constant 1 : index
    %c0_30 = arith.constant 0 : index
    %c0_31 = arith.constant 0 : index
    %32 = vector.load %arg7[%c1_29, %c0_30, %c0_31] : memref<8x2x5xf32, #tpu.memory_space<vmem>>, vector<1x2x5xf32>
    %33 = vector.shape_cast %32 : vector<1x2x5xf32> to vector<2x5xf32>
    %cst_32 = arith.constant dense<0.000000e+00> : vector<2x5xf32>
    %34 = tpu.matmul %28, %1, %cst_32 {dimension_numbers = #tpu.dot_dimension_numbers<[1], [0], [0], [1], [0, 0, 1, 1], [], []>} : vector<2x5xf32>, vector<5x5xf32>, vector<2x5xf32> -> vector<2x5xf32>
    %35 = arith.addf %33, %34 : vector<2x5xf32>
    %36 = math.tanh %35 : vector<2x5xf32>
    %c1_33 = arith.constant 1 : index
    %c0_34 = arith.constant 0 : index
    %c0_35 = arith.constant 0 : index
    %37 = vector.load %arg7[%c1_33, %c0_34, %c0_35] : memref<8x2x5xf32, #tpu.memory_space<vmem>>, vector<1x2x5xf32>
    %38 = vector.shape_cast %37 : vector<1x2x5xf32> to vector<2x5xf32>
    %39 = vector.shape_cast %36 : vector<2x5xf32> to vector<1x2x5xf32>
    tpu.vector_store %arg7[%c1_33, %c0_34, %c0_35], %39 {strides = array<i32>} : memref<8x2x5xf32, #tpu.memory_space<vmem>>, vector<1x2x5xf32>,
    %c2 = arith.constant 2 : index
    %c0_36 = arith.constant 0 : index
    %c0_37 = arith.constant 0 : index
    %40 = vector.load %arg7[%c2, %c0_36, %c0_37] : memref<8x2x5xf32, #tpu.memory_space<vmem>>, vector<1x2x5xf32>
    %41 = vector.shape_cast %40 : vector<1x2x5xf32> to vector<2x5xf32>
    %cst_38 = arith.constant dense<0.000000e+00> : vector<2x5xf32>
    %42 = tpu.matmul %36, %1, %cst_38 {dimension_numbers = #tpu.dot_dimension_numbers<[1], [0], [0], [1], [0, 0, 1, 1], [], []>} : vector<2x5xf32>, vector<5x5xf32>, vector<2x5xf32> -> vector<2x5xf32>
    %43 = arith.addf %41, %42 : vector<2x5xf32>
    %44 = math.tanh %43 : vector<2x5xf32>
    %c2_39 = arith.constant 2 : index
    %c0_40 = arith.constant 0 : index
    %c0_41 = arith.constant 0 : index
    %45 = vector.load %arg7[%c2_39, %c0_40, %c0_41] : memref<8x2x5xf32, #tpu.memory_space<vmem>>, vector<1x2x5xf32>
    %46 = vector.shape_cast %45 : vector<1x2x5xf32> to vector<2x5xf32>
    %47 = vector.shape_cast %44 : vector<2x5xf32> to vector<1x2x5xf32>
    tpu.vector_store %arg7[%c2_39, %c0_40, %c0_41], %47 {strides = array<i32>} : memref<8x2x5xf32, #tpu.memory_space<vmem>>, vector<1x2x5xf32>,
    %c3 = arith.constant 3 : index
    %c0_42 = arith.constant 0 : index
    %c0_43 = arith.constant 0 : index
    %48 = vector.load %arg7[%c3, %c0_42, %c0_43] : memref<8x2x5xf32, #tpu.memory_space<vmem>>, vector<1x2x5xf32>
    %49 = vector.shape_cast %48 : vector<1x2x5xf32> to vector<2x5xf32>
    %cst_44 = arith.constant dense<0.000000e+00> : vector<2x5xf32>
    %50 = tpu.matmul %44, %1, %cst_44 {dimension_numbers = #tpu.dot_dimension_numbers<[1], [0], [0], [1], [0, 0, 1, 1], [], []>} : vector<2x5xf32>, vector<5x5xf32>, vector<2x5xf32> -> vector<2x5xf32>
    %51 = arith.addf %49, %50 : vector<2x5xf32>
    %52 = math.tanh %51 : vector<2x5xf32>
    %c3_45 = arith.constant 3 : index
    %c0_46 = arith.constant 0 : index
    %c0_47 = arith.constant 0 : index
    %53 = vector.load %arg7[%c3_45, %c0_46, %c0_47] : memref<8x2x5xf32, #tpu.memory_space<vmem>>, vector<1x2x5xf32>
    %54 = vector.shape_cast %53 : vector<1x2x5xf32> to vector<2x5xf32>
    %55 = vector.shape_cast %52 : vector<2x5xf32> to vector<1x2x5xf32>
    tpu.vector_store %arg7[%c3_45, %c0_46, %c0_47], %55 {strides = array<i32>} : memref<8x2x5xf32, #tpu.memory_space<vmem>>, vector<1x2x5xf32>,
    %c4 = arith.constant 4 : index
    %c0_48 = arith.constant 0 : index
    %c0_49 = arith.constant 0 : index
    %56 = vector.load %arg7[%c4, %c0_48, %c0_49] : memref<8x2x5xf32, #tpu.memory_space<vmem>>, vector<1x2x5xf32>
    %57 = vector.shape_cast %56 : vector<1x2x5xf32> to vector<2x5xf32>
    %cst_50 = arith.constant dense<0.000000e+00> : vector<2x5xf32>
    %58 = tpu.matmul %52, %1, %cst_50 {dimension_numbers = #tpu.dot_dimension_numbers<[1], [0], [0], [1], [0, 0, 1, 1], [], []>} : vector<2x5xf32>, vector<5x5xf32>, vector<2x5xf32> -> vector<2x5xf32>
    %59 = arith.addf %57, %58 : vector<2x5xf32>
    %60 = math.tanh %59 : vector<2x5xf32>
    %c4_51 = arith.constant 4 : index
    %c0_52 = arith.constant 0 : index
    %c0_53 = arith.constant 0 : index
    %61 = vector.load %arg7[%c4_51, %c0_52, %c0_53] : memref<8x2x5xf32, #tpu.memory_space<vmem>>, vector<1x2x5xf32>
    %62 = vector.shape_cast %61 : vector<1x2x5xf32> to vector<2x5xf32>
    %63 = vector.shape_cast %60 : vector<2x5xf32> to vector<1x2x5xf32>
    tpu.vector_store %arg7[%c4_51, %c0_52, %c0_53], %63 {strides = array<i32>} : memref<8x2x5xf32, #tpu.memory_space<vmem>>, vector<1x2x5xf32>,
    %c5 = arith.constant 5 : index
    %c0_54 = arith.constant 0 : index
    %c0_55 = arith.constant 0 : index
    %64 = vector.load %arg7[%c5, %c0_54, %c0_55] : memref<8x2x5xf32, #tpu.memory_space<vmem>>, vector<1x2x5xf32>
    %65 = vector.shape_cast %64 : vector<1x2x5xf32> to vector<2x5xf32>
    %cst_56 = arith.constant dense<0.000000e+00> : vector<2x5xf32>
    %66 = tpu.matmul %60, %1, %cst_56 {dimension_numbers = #tpu.dot_dimension_numbers<[1], [0], [0], [1], [0, 0, 1, 1], [], []>} : vector<2x5xf32>, vector<5x5xf32>, vector<2x5xf32> -> vector<2x5xf32>
    %67 = arith.addf %65, %66 : vector<2x5xf32>
    %68 = math.tanh %67 : vector<2x5xf32>
    %c5_57 = arith.constant 5 : index
    %c0_58 = arith.constant 0 : index
    %c0_59 = arith.constant 0 : index
    %69 = vector.load %arg7[%c5_57, %c0_58, %c0_59] : memref<8x2x5xf32, #tpu.memory_space<vmem>>, vector<1x2x5xf32>
    %70 = vector.shape_cast %69 : vector<1x2x5xf32> to vector<2x5xf32>
    %71 = vector.shape_cast %68 : vector<2x5xf32> to vector<1x2x5xf32>
    tpu.vector_store %arg7[%c5_57, %c0_58, %c0_59], %71 {strides = array<i32>} : memref<8x2x5xf32, #tpu.memory_space<vmem>>, vector<1x2x5xf32>,
    %c6 = arith.constant 6 : index
    %c0_60 = arith.constant 0 : index
    %c0_61 = arith.constant 0 : index
    %72 = vector.load %arg7[%c6, %c0_60, %c0_61] : memref<8x2x5xf32, #tpu.memory_space<vmem>>, vector<1x2x5xf32>
    %73 = vector.shape_cast %72 : vector<1x2x5xf32> to vector<2x5xf32>
    %cst_62 = arith.constant dense<0.000000e+00> : vector<2x5xf32>
    %74 = tpu.matmul %68, %1, %cst_62 {dimension_numbers = #tpu.dot_dimension_numbers<[1], [0], [0], [1], [0, 0, 1, 1], [], []>} : vector<2x5xf32>, vector<5x5xf32>, vector<2x5xf32> -> vector<2x5xf32>
    %75 = arith.addf %73, %74 : vector<2x5xf32>
    %76 = math.tanh %75 : vector<2x5xf32>
    %c6_63 = arith.constant 6 : index
    %c0_64 = arith.constant 0 : index
    %c0_65 = arith.constant 0 : index
    %77 = vector.load %arg7[%c6_63, %c0_64, %c0_65] : memref<8x2x5xf32, #tpu.memory_space<vmem>>, vector<1x2x5xf32>
    %78 = vector.shape_cast %77 : vector<1x2x5xf32> to vector<2x5xf32>
    %79 = vector.shape_cast %76 : vector<2x5xf32> to vector<1x2x5xf32>
    tpu.vector_store %arg7[%c6_63, %c0_64, %c0_65], %79 {strides = array<i32>} : memref<8x2x5xf32, #tpu.memory_space<vmem>>, vector<1x2x5xf32>,
    %c7 = arith.constant 7 : index
    %c0_66 = arith.constant 0 : index
    %c0_67 = arith.constant 0 : index
    %80 = vector.load %arg7[%c7, %c0_66, %c0_67] : memref<8x2x5xf32, #tpu.memory_space<vmem>>, vector<1x2x5xf32>
    %81 = vector.shape_cast %80 : vector<1x2x5xf32> to vector<2x5xf32>
    %cst_68 = arith.constant dense<0.000000e+00> : vector<2x5xf32>
    %82 = tpu.matmul %76, %1, %cst_68 {dimension_numbers = #tpu.dot_dimension_numbers<[1], [0], [0], [1], [0, 0, 1, 1], [], []>} : vector<2x5xf32>, vector<5x5xf32>, vector<2x5xf32> -> vector<2x5xf32>
    %83 = arith.addf %81, %82 : vector<2x5xf32>
    %84 = math.tanh %83 : vector<2x5xf32>
    %c7_69 = arith.constant 7 : index
    %c0_70 = arith.constant 0 : index
    %c0_71 = arith.constant 0 : index
    %85 = vector.load %arg7[%c7_69, %c0_70, %c0_71] : memref<8x2x5xf32, #tpu.memory_space<vmem>>, vector<1x2x5xf32>
    %86 = vector.shape_cast %85 : vector<1x2x5xf32> to vector<2x5xf32>
    %87 = vector.shape_cast %84 : vector<2x5xf32> to vector<1x2x5xf32>
    tpu.vector_store %arg7[%c7_69, %c0_70, %c0_71], %87 {strides = array<i32>} : memref<8x2x5xf32, #tpu.memory_space<vmem>>, vector<1x2x5xf32>,
    %c0_72 = arith.constant 0 : index
    %c0_73 = arith.constant 0 : index
    %c0_74 = arith.constant 0 : index
    %88 = vector.load %arg7[%c0_72, %c0_73, %c0_74] : memref<8x2x5xf32, #tpu.memory_space<vmem>>, vector<8x1x5xf32>
    %89 = vector.shape_cast %88 : vector<8x1x5xf32> to vector<8x5xf32>
    %cst_75 = arith.constant dense<0.000000e+00> : vector<8x5xf32>
    %90 = tpu.matmul %89, %2, %cst_75 {dimension_numbers = #tpu.dot_dimension_numbers<[1], [0], [0], [1], [0, 0, 1, 1], [], []>} : vector<8x5xf32>, vector<5x5xf32>, vector<8x5xf32> -> vector<8x5xf32>
    %91 = arith.addf %90, %8 : vector<8x5xf32>
    %c0_76 = arith.constant 0 : index
    %c0_77 = arith.constant 0 : index
    %c0_78 = arith.constant 0 : index
    %92 = vector.load %arg6[%c0_76, %c0_77, %c0_78] : memref<2x8x5xf32, #tpu.memory_space<vmem>>, vector<1x8x5xf32>
    %93 = vector.shape_cast %92 : vector<1x8x5xf32> to vector<8x5xf32>
    %94 = vector.shape_cast %91 : vector<8x5xf32> to vector<1x8x5xf32>
    tpu.vector_store %arg6[%c0_76, %c0_77, %c0_78], %94 {strides = array<i32>} : memref<2x8x5xf32, #tpu.memory_space<vmem>>, vector<1x8x5xf32>,
    %c0_79 = arith.constant 0 : index
    %c1_80 = arith.constant 1 : index
    %c0_81 = arith.constant 0 : index
    %95 = vector.load %arg7[%c0_79, %c1_80, %c0_81] : memref<8x2x5xf32, #tpu.memory_space<vmem>>, vector<8x1x5xf32>
    %96 = vector.shape_cast %95 : vector<8x1x5xf32> to vector<8x5xf32>
    %cst_82 = arith.constant dense<0.000000e+00> : vector<8x5xf32>
    %97 = tpu.matmul %96, %2, %cst_82 {dimension_numbers = #tpu.dot_dimension_numbers<[1], [0], [0], [1], [0, 0, 1, 1], [], []>} : vector<8x5xf32>, vector<5x5xf32>, vector<8x5xf32> -> vector<8x5xf32>
    %98 = arith.addf %97, %8 : vector<8x5xf32>
    %c1_83 = arith.constant 1 : index
    %c0_84 = arith.constant 0 : index
    %c0_85 = arith.constant 0 : index
    %99 = vector.load %arg6[%c1_83, %c0_84, %c0_85] : memref<2x8x5xf32, #tpu.memory_space<vmem>>, vector<1x8x5xf32>
    %100 = vector.shape_cast %99 : vector<1x8x5xf32> to vector<8x5xf32>
    %101 = vector.shape_cast %98 : vector<8x5xf32> to vector<1x8x5xf32>
    tpu.vector_store %arg6[%c1_83, %c0_84, %c0_85], %101 {strides = array<i32>} : memref<2x8x5xf32, #tpu.memory_space<vmem>>, vector<1x8x5xf32>,
    return
  }
}

</mosaic_0001>

<llo_original>
// kernel: tpu_custom_call.1
$region0: #{tpu_custom_call.1}
  #allocation0 [shape = 'u32[]', space=smem, size = 0x4, offset = 0x4, fixed_abs, tag = 'smem constant byte address 0x4 - core index']
  #allocation1 [shape = 'u32[144,128]{1,0:T(1,128)}', space=vmem, size = 0x12000, scoped, tag = 'internal scratch']
  #allocation2 [shape = 'f32[8,2,5]{2,1,0:T(2,128)}', space=vmem, size = 0x2000, scoped, tag = 'scratch operand']
  %s0 = inlined_call_operand.vmem [shape: f32[2,8,5], index: 0, kind: input, shape index: {}]
  %s1 = inlined_call_operand.vmem [shape: f32[5,5], index: 1, kind: input, shape index: {}]
  %s2 = inlined_call_operand.vmem [shape: f32[5,5], index: 2, kind: input, shape index: {}]
  %s3 = inlined_call_operand.vmem [shape: f32[1,5], index: 3, kind: input, shape index: {}]
  %s4 = inlined_call_operand.vmem [shape: f32[5,5], index: 4, kind: input, shape index: {}]
  %s5 = inlined_call_operand.vmem [shape: f32[1,5], index: 5, kind: input, shape index: {}]
  %s6 = inlined_call_operand.vmem [shape: f32[2,8,5], index: 6, kind: output, shape index: {}]
  %s7 = sld [smem:[#allocation0]]
  $region34: #{tpu_custom_call.1} parent=0
    _
  %s9 = ssub.s32 1, %s7
  %s10 = scalar_select 0, %s9, %s7
  // Predicated region
  $region2: #{tpu_custom_call.1} parent=0 // pred_check
    _
  $region3: #{tpu_custom_call.1} parent=0 // pred_check_branch
    %12 = sbr.rel (0) target = $region5
  $region4: #{tpu_custom_call.1} parent=0 // pred_region
    _
  $region5: #{tpu_custom_call.1} parent=0 // pred_fallthru
    _
  // Predicated region
  $region6: #{tpu_custom_call.1} parent=0 // pred_check
    _
  $region7: #{tpu_custom_call.1} parent=0 // pred_check_branch
    %14 = sbr.rel (0) target = $region9
  $region8: #{tpu_custom_call.1} parent=0 // pred_region
    _
  $region9: #{tpu_custom_call.1} parent=0 // pred_fallthru
    _
  // Predicated region
  $region10: #{tpu_custom_call.1} parent=0 // pred_check
    _
  $region11: #{tpu_custom_call.1} parent=0 // pred_check_branch
    %16 = sbr.rel (0) target = $region13
  $region12: #{tpu_custom_call.1} parent=0 // pred_region
    _
  $region13: #{tpu_custom_call.1} parent=0 // pred_fallthru
    _
  // Predicated region
  $region14: #{tpu_custom_call.1} parent=0 // pred_check
    _
  $region15: #{tpu_custom_call.1} parent=0 // pred_check_branch
    %18 = sbr.rel (0) target = $region17
  $region16: #{tpu_custom_call.1} parent=0 // pred_region
    _
  $region17: #{tpu_custom_call.1} parent=0 // pred_fallthru
    _
  // Predicated region
  $region18: #{tpu_custom_call.1} parent=0 // pred_check
    _
  $region19: #{tpu_custom_call.1} parent=0 // pred_check_branch
    %20 = sbr.rel (0) target = $region21
  $region20: #{tpu_custom_call.1} parent=0 // pred_region
    _
  $region21: #{tpu_custom_call.1} parent=0 // pred_fallthru
    _
  // Predicated region
  $region22: #{tpu_custom_call.1} parent=0 // pred_check
    _
  $region23: #{tpu_custom_call.1} parent=0 // pred_check_branch
    %22 = sbr.rel (0) target = $region25
  $region24: #{tpu_custom_call.1} parent=0 // pred_region
    _
  $region25: #{tpu_custom_call.1} parent=0 // pred_fallthru
    _
  %v23 = vld [vmem:[%s1] sm:$0x1f]
  %v24 = vld [vmem:[%s2] sm:$0x1f]
  %v25 = vld [vmem:[%s4] sm:$0x1f]
  %v26 = vld [vmem:[%s3] sm:$0x1]
  %v28 = vlaneseq
  %v29 = vshrl.u32 %v28, 7
  %v30 = vsub.s32 0, %v29
  %v31 = vrot.slane %v26, %v30
  %v33 = vld [vmem:[%s5] sm:$0x1]
  %v35 = vlaneseq
  %v36 = vshrl.u32 %v35, 7
  %v37 = vsub.s32 0, %v36
  %v38 = vrot.slane %v33, %v37
  %v40 = vld [vmem:[%s0] sm:$0xff]
  %vm41 = vcmask 39936
  %v43 = vsel %vm41, %v40, 0
  %vm45 = vcmask 1044480
  %v47 = vsel %vm45, %v23, 0
  %49 = vmatprep.subr.mxu0 0.0
  %50 = vmatpush1.msra.mxu0 %v47
  %51 = vmatprep.subr.mxu0 0.0
  %52 = vmatpush1.msra.mxu0 0.0
  %53 = vmatprep.subr.mxu0 0.0
  %54 = vmatpush1.msra.mxu0 0.0
  %55 = vmatprep.subr.mxu0 0.0
  %56 = vmatpush1.msra.mxu0 0.0
  %57 = vmatprep.subr.mxu0 0.0
  %58 = vmatpush1.msra.mxu0 0.0
  %59 = vmatprep.subr.mxu0 0.0
  %60 = vmatpush1.msra.mxu0 0.0
  %61 = vmatprep.subr.mxu0 0.0
  %62 = vmatpush1.msra.mxu0 0.0
  %63 = vmatprep.subr.mxu0 0.0
  %64 = vmatpush1.msra.mxu0 0.0
  %65 = vmatprep.subr.mxu0 0.0
  %66 = vmatpush1.msra.mxu0 0.0
  %67 = vmatprep.subr.mxu0 0.0
  %68 = vmatpush1.msra.mxu0 0.0
  %69 = vmatprep.subr.mxu0 0.0
  %70 = vmatpush1.msra.mxu0 0.0
  %71 = vmatprep.subr.mxu0 0.0
  %72 = vmatpush1.msra.mxu0 0.0
  %73 = vmatprep.subr.mxu0 0.0
  %74 = vmatpush1.msra.mxu0 0.0
  %75 = vmatprep.subr.mxu0 0.0
  %76 = vmatpush1.msra.mxu0 0.0
  %77 = vmatprep.subr.mxu0 0.0
  %78 = vmatpush1.msra.mxu0 0.0
  %79 = vmatprep.subr.mxu0 0.0
  %80 = vmatpush1.msra.mxu0 0.0
  %81 = vmatprep.subr.mxu0 0.0
  %82 = vmatpush1.msra.mxu0 0.0
  %83 = vmatprep.subr.mxu0 0.0
  %84 = vmatpush1.msra.mxu0 0.0
  %85 = vmatprep.subr.mxu0 0.0
  %86 = vmatpush1.msra.mxu0 0.0
  %87 = vmatprep.subr.mxu0 0.0
  %88 = vmatpush1.msra.mxu0 0.0
  %89 = vmatprep.subr.mxu0 0.0
  %90 = vmatpush1.msra.mxu0 0.0
  %91 = vmatprep.subr.mxu0 0.0
  %92 = vmatpush1.msra.mxu0 0.0
  %93 = vmatprep.subr.mxu0 0.0
  %94 = vmatpush1.msra.mxu0 0.0
  %95 = vmatprep.subr.mxu0 0.0
  %96 = vmatpush1.msra.mxu0 0.0
  %97 = vmatprep.subr.mxu0 0.0
  %98 = vmatpush1.msra.mxu0 0.0
  %99 = vmatprep.subr.mxu0 0.0
  %100 = vmatpush1.msra.mxu0 0.0
  %101 = vmatprep.subr.mxu0 0.0
  %102 = vmatpush1.msra.mxu0 0.0
  %103 = vmatprep.subr.mxu0 0.0
  %104 = vmatpush1.msra.mxu0 0.0
  %105 = vmatprep.subr.mxu0 0.0
  %106 = vmatpush1.msra.mxu0 0.0
  %107 = vmatprep.subr.mxu0 0.0
  %108 = vmatpush1.msra.mxu0 0.0
  %109 = vmatprep.subr.mxu0 0.0
  %110 = vmatpush1.msra.mxu0 0.0
  %111 = vmatprep.subr.mxu0 0.0
  %112 = vmatpush1.msra.mxu0 0.0
  %113 = vmatprep.mubr.f32.mxu0 0.0
  %114 = vmatmul.mubr.f32.gmra.mrb[0].mxu0 %v43
  %v115 = vpop.f32.mrb[0].mxu0
  %v116 = vadd.f32 %v31, %v115
  %v117 = vpop.f32.mrb[0].mxu0
  %118 = vdwg.mxu0
  %v120 = vcombine.high %v116, %v116
  %v122 = vunpack.c.l.s4 1966171168
  %v123 = vunpack.c.0.s8 %v122
  %v124 = vlaneseq
  %v125 = vshrl.u32 %v124, 7
  %v126 = vsub.s32 %v123, %v125
  %v127 = vrot.slane %v116, %v126
  %v129 = vunpack.c.l.s4 1966171168
  %v130 = vunpack.c.0.s8 %v129
  %v131 = vlaneseq
  %v132 = vshrl.u32 %v131, 7
  %v133 = vsub.s32 %v130, %v132
  %v134 = vrot.slane %v120, %v133
  %v135 = vcombine.high %v127, %v127
  %v136 = vcombine.high %v134, %v134
  %v138 = vunpack.c.l.s4 1966171168
  %v139 = vunpack.c.0.s8 %v138
  %v140 = vlaneseq
  %v141 = vshrl.u32 %v140, 7
  %v142 = vsub.s32 %v139, %v141
  %v143 = vrot.slane %v127, %v142
  %v145 = vunpack.c.l.s4 1966171168
  %v146 = vunpack.c.0.s8 %v145
  %v147 = vlaneseq
  %v148 = vshrl.u32 %v147, 7
  %v149 = vsub.s32 %v146, %v148
  %v150 = vrot.slane %v134, %v149
  %v152 = vunpack.c.l.s4 1966171168
  %v153 = vunpack.c.0.s8 %v152
  %v154 = vlaneseq
  %v155 = vshrl.u32 %v154, 7
  %v156 = vsub.s32 %v153, %v155
  %v157 = vrot.slane %v135, %v156
  %v159 = vunpack.c.l.s4 1966171168
  %v160 = vunpack.c.0.s8 %v159
  %v161 = vlaneseq
  %v162 = vshrl.u32 %v161, 7
  %v163 = vsub.s32 %v160, %v162
  %v164 = vrot.slane %v136, %v163
  %v165 = vcombine.high %v143, %v143
  %v166 = vcombine.high %v150, %v150
  %v167 = vcombine.high %v157, %v157
  %v168 = vcombine.high %v164, %v164
  %vm177 = vcmask 32768
  %178 = vst.msk [vmem:[#allocation2] sm:$0x1] %vm177, %v143
  %179 = vst.msk [vmem:[#allocation2 + $0x2] sm:$0x1] %vm177, %v157
  %180 = vst.msk [vmem:[#allocation2 + $0x4] sm:$0x1] %vm177, %v165
  %181 = vst.msk [vmem:[#allocation2 + $0x6] sm:$0x1] %vm177, %v167
  %182 = vst.msk [vmem:[#allocation2 + $0x8] sm:$0x1] %vm177, %v150
  %183 = vst.msk [vmem:[#allocation2 + $0xa] sm:$0x1] %vm177, %v164
  %184 = vst.msk [vmem:[#allocation2 + $0xc] sm:$0x1] %vm177, %v166
  %185 = vst.msk [vmem:[#allocation2 + $0xe] sm:$0x1] %vm177, %v168
  %s186 = scalar_lea.vmem %s0, 8
  %v187 = vld [vmem:[%s186] sm:$0xff]
  %v189 = vsel %vm41, %v187, 0
  %191 = vmatprep.subr.mxu0 0.0
  %192 = vmatpush1.msra.mxu0 %v47
  %193 = vmatprep.subr.mxu0 0.0
  %194 = vmatpush1.msra.mxu0 0.0
  %195 = vmatprep.subr.mxu0 0.0
  %196 = vmatpush1.msra.mxu0 0.0
  %197 = vmatprep.subr.mxu0 0.0
  %198 = vmatpush1.msra.mxu0 0.0
  %199 = vmatprep.subr.mxu0 0.0
  %200 = vmatpush1.msra.mxu0 0.0
  %201 = vmatprep.subr.mxu0 0.0
  %202 = vmatpush1.msra.mxu0 0.0
  %203 = vmatprep.subr.mxu0 0.0
  %204 = vmatpush1.msra.mxu0 0.0
  %205 = vmatprep.subr.mxu0 0.0
  %206 = vmatpush1.msra.mxu0 0.0
  %207 = vmatprep.subr.mxu0 0.0
  %208 = vmatpush1.msra.mxu0 0.0
  %209 = vmatprep.subr.mxu0 0.0
  %210 = vmatpush1.msra.mxu0 0.0
  %211 = vmatprep.subr.mxu0 0.0
  %212 = vmatpush1.msra.mxu0 0.0
  %213 = vmatprep.subr.mxu0 0.0
  %214 = vmatpush1.msra.mxu0 0.0
  %215 = vmatprep.subr.mxu0 0.0
  %216 = vmatpush1.msra.mxu0 0.0
  %217 = vmatprep.subr.mxu0 0.0
  %218 = vmatpush1.msra.mxu0 0.0
  %219 = vmatprep.subr.mxu0 0.0
  %220 = vmatpush1.msra.mxu0 0.0
  %221 = vmatprep.subr.mxu0 0.0
  %222 = vmatpush1.msra.mxu0 0.0
  %223 = vmatprep.subr.mxu0 0.0
  %224 = vmatpush1.msra.mxu0 0.0
  %225 = vmatprep.subr.mxu0 0.0
  %226 = vmatpush1.msra.mxu0 0.0
  %227 = vmatprep.subr.mxu0 0.0
  %228 = vmatpush1.msra.mxu0 0.0
  %229 = vmatprep.subr.mxu0 0.0
  %230 = vmatpush1.msra.mxu0 0.0
  %231 = vmatprep.subr.mxu0 0.0
  %232 = vmatpush1.msra.mxu0 0.0
  %233 = vmatprep.subr.mxu0 0.0
  %234 = vmatpush1.msra.mxu0 0.0
  %235 = vmatprep.subr.mxu0 0.0
  %236 = vmatpush1.msra.mxu0 0.0
  %237 = vmatprep.subr.mxu0 0.0
  %238 = vmatpush1.msra.mxu0 0.0
  %239 = vmatprep.subr.mxu0 0.0
  %240 = vmatpush1.msra.mxu0 0.0
  %241 = vmatprep.subr.mxu0 0.0
  %242 = vmatpush1.msra.mxu0 0.0
  %243 = vmatprep.subr.mxu0 0.0
  %244 = vmatpush1.msra.mxu0 0.0
  %245 = vmatprep.subr.mxu0 0.0
  %246 = vmatpush1.msra.mxu0 0.0
  %247 = vmatprep.subr.mxu0 0.0
  %248 = vmatpush1.msra.mxu0 0.0
  %249 = vmatprep.subr.mxu0 0.0
  %250 = vmatpush1.msra.mxu0 0.0
  %251 = vmatprep.subr.mxu0 0.0
  %252 = vmatpush1.msra.mxu0 0.0
  %253 = vmatprep.subr.mxu0 0.0
  %254 = vmatpush1.msra.mxu0 0.0
  %255 = vmatprep.mubr.f32.mxu0 0.0
  %256 = vmatmul.mubr.f32.gmra.mrb[0].mxu0 %v189
  %v257 = vpop.f32.mrb[0].mxu0
  %v258 = vadd.f32 %v31, %v257
  %v259 = vpop.f32.mrb[0].mxu0
  %260 = vdwg.mxu0
  %v262 = vcombine.high %v258, %v258
  %v264 = vunpack.c.l.s4 1966171168
  %v265 = vunpack.c.0.s8 %v264
  %v266 = vlaneseq
  %v267 = vshrl.u32 %v266, 7
  %v268 = vsub.s32 %v265, %v267
  %v269 = vrot.slane %v258, %v268
  %v271 = vunpack.c.l.s4 1966171168
  %v272 = vunpack.c.0.s8 %v271
  %v273 = vlaneseq
  %v274 = vshrl.u32 %v273, 7
  %v275 = vsub.s32 %v272, %v274
  %v276 = vrot.slane %v262, %v275
  %v277 = vcombine.high %v269, %v269
  %v278 = vcombine.high %v276, %v276
  %v280 = vunpack.c.l.s4 1966171168
  %v281 = vunpack.c.0.s8 %v280
  %v282 = vlaneseq
  %v283 = vshrl.u32 %v282, 7
  %v284 = vsub.s32 %v281, %v283
  %v285 = vrot.slane %v269, %v284
  %v287 = vunpack.c.l.s4 1966171168
  %v288 = vunpack.c.0.s8 %v287
  %v289 = vlaneseq
  %v290 = vshrl.u32 %v289, 7
  %v291 = vsub.s32 %v288, %v290
  %v292 = vrot.slane %v276, %v291
  %v294 = vunpack.c.l.s4 1966171168
  %v295 = vunpack.c.0.s8 %v294
  %v296 = vlaneseq
  %v297 = vshrl.u32 %v296, 7
  %v298 = vsub.s32 %v295, %v297
  %v299 = vrot.slane %v277, %v298
  %v301 = vunpack.c.l.s4 1966171168
  %v302 = vunpack.c.0.s8 %v301
  %v303 = vlaneseq
  %v304 = vshrl.u32 %v303, 7
  %v305 = vsub.s32 %v302, %v304
  %v306 = vrot.slane %v278, %v305
  %v307 = vcombine.high %v285, %v285
  %v308 = vcombine.high %v292, %v292
  %v309 = vcombine.high %v299, %v299
  %v310 = vcombine.high %v306, %v306
  %319 = vst.msk [vmem:[#allocation2 + $0x1] sm:$0x1] %vm177, %v285
  %320 = vst.msk [vmem:[#allocation2 + $0x3] sm:$0x1] %vm177, %v299
  %321 = vst.msk [vmem:[#allocation2 + $0x5] sm:$0x1] %vm177, %v307
  %322 = vst.msk [vmem:[#allocation2 + $0x7] sm:$0x1] %vm177, %v309
  %323 = vst.msk [vmem:[#allocation2 + $0x9] sm:$0x1] %vm177, %v292
  %324 = vst.msk [vmem:[#allocation2 + $0xb] sm:$0x1] %vm177, %v306
  %325 = vst.msk [vmem:[#allocation2 + $0xd] sm:$0x1] %vm177, %v308
  %326 = vst.msk [vmem:[#allocation2 + $0xf] sm:$0x1] %vm177, %v310
  %v327 = vld [vmem:[#allocation2] sm:$0x3]
  %v329 = vsel %vm41, 0.0, 0
  %v332 = vsel %vm45, %v24, 0
  %334 = vmatprep.subr.mxu0 0.0
  %335 = vmatpush1.msra.mxu0 %v332
  %336 = vmatprep.subr.mxu0 0.0
  %337 = vmatpush1.msra.mxu0 0.0
  %338 = vmatprep.subr.mxu0 0.0
  %339 = vmatpush1.msra.mxu0 0.0
  %340 = vmatprep.subr.mxu0 0.0
  %341 = vmatpush1.msra.mxu0 0.0
  %342 = vmatprep.subr.mxu0 0.0
  %343 = vmatpush1.msra.mxu0 0.0
  %344 = vmatprep.subr.mxu0 0.0
  %345 = vmatpush1.msra.mxu0 0.0
  %346 = vmatprep.subr.mxu0 0.0
  %347 = vmatpush1.msra.mxu0 0.0
  %348 = vmatprep.subr.mxu0 0.0
  %349 = vmatpush1.msra.mxu0 0.0
  %350 = vmatprep.subr.mxu0 0.0
  %351 = vmatpush1.msra.mxu0 0.0
  %352 = vmatprep.subr.mxu0 0.0
  %353 = vmatpush1.msra.mxu0 0.0
  %354 = vmatprep.subr.mxu0 0.0
  %355 = vmatpush1.msra.mxu0 0.0
  %356 = vmatprep.subr.mxu0 0.0
  %357 = vmatpush1.msra.mxu0 0.0
  %358 = vmatprep.subr.mxu0 0.0
  %359 = vmatpush1.msra.mxu0 0.0
  %360 = vmatprep.subr.mxu0 0.0
  %361 = vmatpush1.msra.mxu0 0.0
  %362 = vmatprep.subr.mxu0 0.0
  %363 = vmatpush1.msra.mxu0 0.0
  %364 = vmatprep.subr.mxu0 0.0
  %365 = vmatpush1.msra.mxu0 0.0
  %366 = vmatprep.subr.mxu0 0.0
  %367 = vmatpush1.msra.mxu0 0.0
  %368 = vmatprep.subr.mxu0 0.0
  %369 = vmatpush1.msra.mxu0 0.0
  %370 = vmatprep.subr.mxu0 0.0
  %371 = vmatpush1.msra.mxu0 0.0
  %372 = vmatprep.subr.mxu0 0.0
  %373 = vmatpush1.msra.mxu0 0.0
  %374 = vmatprep.subr.mxu0 0.0
  %375 = vmatpush1.msra.mxu0 0.0
  %376 = vmatprep.subr.mxu0 0.0
  %377 = vmatpush1.msra.mxu0 0.0
  %378 = vmatprep.subr.mxu0 0.0
  %379 = vmatpush1.msra.mxu0 0.0
  %380 = vmatprep.subr.mxu0 0.0
  %381 = vmatpush1.msra.mxu0 0.0
  %382 = vmatprep.subr.mxu0 0.0
  %383 = vmatpush1.msra.mxu0 0.0
  %384 = vmatprep.subr.mxu0 0.0
  %385 = vmatpush1.msra.mxu0 0.0
  %386 = vmatprep.subr.mxu0 0.0
  %387 = vmatpush1.msra.mxu0 0.0
  %388 = vmatprep.subr.mxu0 0.0
  %389 = vmatpush1.msra.mxu0 0.0
  %390 = vmatprep.subr.mxu0 0.0
  %391 = vmatpush1.msra.mxu0 0.0
  %392 = vmatprep.subr.mxu0 0.0
  %393 = vmatpush1.msra.mxu0 0.0
  %394 = vmatprep.subr.mxu0 0.0
  %395 = vmatpush1.msra.mxu0 0.0
  %396 = vmatprep.subr.mxu0 0.0
  %397 = vmatpush1.msra.mxu0 0.0
  %398 = vmatprep.mubr.f32.mxu0 0.0
  %399 = vmatmul.mubr.f32.gmra.mrb[0].mxu0 %v329
  %v400 = vpop.f32.mrb[0].mxu0
  %v401 = vadd.f32 0.0, %v400
  %v402 = vpop.f32.mrb[0].mxu0
  %403 = vdwg.mxu0
  %v404 = vadd.f32 %v327, %v401
  %v405 = vtanh.pop %v404
  %vm406 = vcmask 33792
  %407 = vst.msk [vmem:[#allocation2] sm:$0x3] %vm406, %v405
  %s408 = scalar_lea.vmem [#allocation2], 2
  %v409 = vld [vmem:[%s408] sm:$0x3]
  %v411 = vsel %vm41, %v405, 0
  %413 = vmatprep.subr.mxu0 0.0
  %414 = vmatpush1.msra.mxu0 %v332
  %415 = vmatprep.subr.mxu0 0.0
  %416 = vmatpush1.msra.mxu0 0.0
  %417 = vmatprep.subr.mxu0 0.0
  %418 = vmatpush1.msra.mxu0 0.0
  %419 = vmatprep.subr.mxu0 0.0
  %420 = vmatpush1.msra.mxu0 0.0
  %421 = vmatprep.subr.mxu0 0.0
  %422 = vmatpush1.msra.mxu0 0.0
  %423 = vmatprep.subr.mxu0 0.0
  %424 = vmatpush1.msra.mxu0 0.0
  %425 = vmatprep.subr.mxu0 0.0
  %426 = vmatpush1.msra.mxu0 0.0
  %427 = vmatprep.subr.mxu0 0.0
  %428 = vmatpush1.msra.mxu0 0.0
  %429 = vmatprep.subr.mxu0 0.0
  %430 = vmatpush1.msra.mxu0 0.0
  %431 = vmatprep.subr.mxu0 0.0
  %432 = vmatpush1.msra.mxu0 0.0
  %433 = vmatprep.subr.mxu0 0.0
  %434 = vmatpush1.msra.mxu0 0.0
  %435 = vmatprep.subr.mxu0 0.0
  %436 = vmatpush1.msra.mxu0 0.0
  %437 = vmatprep.subr.mxu0 0.0
  %438 = vmatpush1.msra.mxu0 0.0
  %439 = vmatprep.subr.mxu0 0.0
  %440 = vmatpush1.msra.mxu0 0.0
  %441 = vmatprep.subr.mxu0 0.0
  %442 = vmatpush1.msra.mxu0 0.0
  %443 = vmatprep.subr.mxu0 0.0
  %444 = vmatpush1.msra.mxu0 0.0
  %445 = vmatprep.subr.mxu0 0.0
  %446 = vmatpush1.msra.mxu0 0.0
  %447 = vmatprep.subr.mxu0 0.0
  %448 = vmatpush1.msra.mxu0 0.0
  %449 = vmatprep.subr.mxu0 0.0
  %450 = vmatpush1.msra.mxu0 0.0
  %451 = vmatprep.subr.mxu0 0.0
  %452 = vmatpush1.msra.mxu0 0.0
  %453 = vmatprep.subr.mxu0 0.0
  %454 = vmatpush1.msra.mxu0 0.0
  %455 = vmatprep.subr.mxu0 0.0
  %456 = vmatpush1.msra.mxu0 0.0
  %457 = vmatprep.subr.mxu0 0.0
  %458 = vmatpush1.msra.mxu0 0.0
  %459 = vmatprep.subr.mxu0 0.0
  %460 = vmatpush1.msra.mxu0 0.0
  %461 = vmatprep.subr.mxu0 0.0
  %462 = vmatpush1.msra.mxu0 0.0
  %463 = vmatprep.subr.mxu0 0.0
  %464 = vmatpush1.msra.mxu0 0.0
  %465 = vmatprep.subr.mxu0 0.0
  %466 = vmatpush1.msra.mxu0 0.0
  %467 = vmatprep.subr.mxu0 0.0
  %468 = vmatpush1.msra.mxu0 0.0
  %469 = vmatprep.subr.mxu0 0.0
  %470 = vmatpush1.msra.mxu0 0.0
  %471 = vmatprep.subr.mxu0 0.0
  %472 = vmatpush1.msra.mxu0 0.0
  %473 = vmatprep.subr.mxu0 0.0
  %474 = vmatpush1.msra.mxu0 0.0
  %475 = vmatprep.subr.mxu0 0.0
  %476 = vmatpush1.msra.mxu0 0.0
  %477 = vmatprep.mubr.f32.mxu0 0.0
  %478 = vmatmul.mubr.f32.gmra.mrb[0].mxu0 %v411
  %v479 = vpop.f32.mrb[0].mxu0
  %v480 = vadd.f32 0.0, %v479
  %v481 = vpop.f32.mrb[0].mxu0
  %482 = vdwg.mxu0
  %v483 = vadd.f32 %v409, %v480
  %v484 = vtanh.pop %v483
  %485 = vst.msk [vmem:[%s408] sm:$0x3] %vm406, %v484
  %s486 = scalar_lea.vmem [#allocation2], 4
  %v487 = vld [vmem:[%s486] sm:$0x3]
  %v489 = vsel %vm41, %v484, 0
  %491 = vmatprep.subr.mxu0 0.0
  %492 = vmatpush1.msra.mxu0 %v332
  %493 = vmatprep.subr.mxu0 0.0
  %494 = vmatpush1.msra.mxu0 0.0
  %495 = vmatprep.subr.mxu0 0.0
  %496 = vmatpush1.msra.mxu0 0.0
  %497 = vmatprep.subr.mxu0 0.0
  %498 = vmatpush1.msra.mxu0 0.0
  %499 = vmatprep.subr.mxu0 0.0
  %500 = vmatpush1.msra.mxu0 0.0
  %501 = vmatprep.subr.mxu0 0.0
  %502 = vmatpush1.msra.mxu0 0.0
  %503 = vmatprep.subr.mxu0 0.0
  %504 = vmatpush1.msra.mxu0 0.0
  %505 = vmatprep.subr.mxu0 0.0
  %506 = vmatpush1.msra.mxu0 0.0
  %507 = vmatprep.subr.mxu0 0.0
  %508 = vmatpush1.msra.mxu0 0.0
  %509 = vmatprep.subr.mxu0 0.0
  %510 = vmatpush1.msra.mxu0 0.0
  %511 = vmatprep.subr.mxu0 0.0
  %512 = vmatpush1.msra.mxu0 0.0
  %513 = vmatprep.subr.mxu0 0.0
  %514 = vmatpush1.msra.mxu0 0.0
  %515 = vmatprep.subr.mxu0 0.0
  %516 = vmatpush1.msra.mxu0 0.0
  %517 = vmatprep.subr.mxu0 0.0
  %518 = vmatpush1.msra.mxu0 0.0
  %519 = vmatprep.subr.mxu0 0.0
  %520 = vmatpush1.msra.mxu0 0.0
  %521 = vmatprep.subr.mxu0 0.0
  %522 = vmatpush1.msra.mxu0 0.0
  %523 = vmatprep.subr.mxu0 0.0
  %524 = vmatpush1.msra.mxu0 0.0
  %525 = vmatprep.subr.mxu0 0.0
  %526 = vmatpush1.msra.mxu0 0.0
  %527 = vmatprep.subr.mxu0 0.0
  %528 = vmatpush1.msra.mxu0 0.0
  %529 = vmatprep.subr.mxu0 0.0
  %530 = vmatpush1.msra.mxu0 0.0
  %531 = vmatprep.subr.mxu0 0.0
  %532 = vmatpush1.msra.mxu0 0.0
  %533 = vmatprep.subr.mxu0 0.0
  %534 = vmatpush1.msra.mxu0 0.0
  %535 = vmatprep.subr.mxu0 0.0
  %536 = vmatpush1.msra.mxu0 0.0
  %537 = vmatprep.subr.mxu0 0.0
  %538 = vmatpush1.msra.mxu0 0.0
  %539 = vmatprep.subr.mxu0 0.0
  %540 = vmatpush1.msra.mxu0 0.0
  %541 = vmatprep.subr.mxu0 0.0
  %542 = vmatpush1.msra.mxu0 0.0
  %543 = vmatprep.subr.mxu0 0.0
  %544 = vmatpush1.msra.mxu0 0.0
  %545 = vmatprep.subr.mxu0 0.0
  %546 = vmatpush1.msra.mxu0 0.0
  %547 = vmatprep.subr.mxu0 0.0
  %548 = vmatpush1.msra.mxu0 0.0
  %549 = vmatprep.subr.mxu0 0.0
  %550 = vmatpush1.msra.mxu0 0.0
  %551 = vmatprep.subr.mxu0 0.0
  %552 = vmatpush1.msra.mxu0 0.0
  %553 = vmatprep.subr.mxu0 0.0
  %554 = vmatpush1.msra.mxu0 0.0
  %555 = vmatprep.mubr.f32.mxu0 0.0
  %556 = vmatmul.mubr.f32.gmra.mrb[0].mxu0 %v489
  %v557 = vpop.f32.mrb[0].mxu0
  %v558 = vadd.f32 0.0, %v557
  %v559 = vpop.f32.mrb[0].mxu0
  %560 = vdwg.mxu0
  %v561 = vadd.f32 %v487, %v558
  %v562 = vtanh.pop %v561
  %563 = vst.msk [vmem:[%s486] sm:$0x3] %vm406, %v562
  %s564 = scalar_lea.vmem [#allocation2], 6
  %v565 = vld [vmem:[%s564] sm:$0x3]
  %v567 = vsel %vm41, %v562, 0
  %569 = vmatprep.subr.mxu0 0.0
  %570 = vmatpush1.msra.mxu0 %v332
  %571 = vmatprep.subr.mxu0 0.0
  %572 = vmatpush1.msra.mxu0 0.0
  %573 = vmatprep.subr.mxu0 0.0
  %574 = vmatpush1.msra.mxu0 0.0
  %575 = vmatprep.subr.mxu0 0.0
  %576 = vmatpush1.msra.mxu0 0.0
  %577 = vmatprep.subr.mxu0 0.0
  %578 = vmatpush1.msra.mxu0 0.0
  %579 = vmatprep.subr.mxu0 0.0
  %580 = vmatpush1.msra.mxu0 0.0
  %581 = vmatprep.subr.mxu0 0.0
  %582 = vmatpush1.msra.mxu0 0.0
  %583 = vmatprep.subr.mxu0 0.0
  %584 = vmatpush1.msra.mxu0 0.0
  %585 = vmatprep.subr.mxu0 0.0
  %586 = vmatpush1.msra.mxu0 0.0
  %587 = vmatprep.subr.mxu0 0.0
  %588 = vmatpush1.msra.mxu0 0.0
  %589 = vmatprep.subr.mxu0 0.0
  %590 = vmatpush1.msra.mxu0 0.0
  %591 = vmatprep.subr.mxu0 0.0
  %592 = vmatpush1.msra.mxu0 0.0
  %593 = vmatprep.subr.mxu0 0.0
  %594 = vmatpush1.msra.mxu0 0.0
  %595 = vmatprep.subr.mxu0 0.0
  %596 = vmatpush1.msra.mxu0 0.0
  %597 = vmatprep.subr.mxu0 0.0
  %598 = vmatpush1.msra.mxu0 0.0
  %599 = vmatprep.subr.mxu0 0.0
  %600 = vmatpush1.msra.mxu0 0.0
  %601 = vmatprep.subr.mxu0 0.0
  %602 = vmatpush1.msra.mxu0 0.0
  %603 = vmatprep.subr.mxu0 0.0
  %604 = vmatpush1.msra.mxu0 0.0
  %605 = vmatprep.subr.mxu0 0.0
  %606 = vmatpush1.msra.mxu0 0.0
  %607 = vmatprep.subr.mxu0 0.0
  %608 = vmatpush1.msra.mxu0 0.0
  %609 = vmatprep.subr.mxu0 0.0
  %610 = vmatpush1.msra.mxu0 0.0
  %611 = vmatprep.subr.mxu0 0.0
  %612 = vmatpush1.msra.mxu0 0.0
  %613 = vmatprep.subr.mxu0 0.0
  %614 = vmatpush1.msra.mxu0 0.0
  %615 = vmatprep.subr.mxu0 0.0
  %616 = vmatpush1.msra.mxu0 0.0
  %617 = vmatprep.subr.mxu0 0.0
  %618 = vmatpush1.msra.mxu0 0.0
  %619 = vmatprep.subr.mxu0 0.0
  %620 = vmatpush1.msra.mxu0 0.0
  %621 = vmatprep.subr.mxu0 0.0
  %622 = vmatpush1.msra.mxu0 0.0
  %623 = vmatprep.subr.mxu0 0.0
  %624 = vmatpush1.msra.mxu0 0.0
  %625 = vmatprep.subr.mxu0 0.0
  %626 = vmatpush1.msra.mxu0 0.0
  %627 = vmatprep.subr.mxu0 0.0
  %628 = vmatpush1.msra.mxu0 0.0
  %629 = vmatprep.subr.mxu0 0.0
  %630 = vmatpush1.msra.mxu0 0.0
  %631 = vmatprep.subr.mxu0 0.0
  %632 = vmatpush1.msra.mxu0 0.0
  %633 = vmatprep.mubr.f32.mxu0 0.0
  %634 = vmatmul.mubr.f32.gmra.mrb[0].mxu0 %v567
  %v635 = vpop.f32.mrb[0].mxu0
  %v636 = vadd.f32 0.0, %v635
  %v637 = vpop.f32.mrb[0].mxu0
  %638 = vdwg.mxu0
  %v639 = vadd.f32 %v565, %v636
  %v640 = vtanh.pop %v639
  %641 = vst.msk [vmem:[%s564] sm:$0x3] %vm406, %v640
  %s642 = scalar_lea.vmem [#allocation2], 8
  %v643 = vld [vmem:[%s642] sm:$0x3]
  %v645 = vsel %vm41, %v640, 0
  %647 = vmatprep.subr.mxu0 0.0
  %648 = vmatpush1.msra.mxu0 %v332
  %649 = vmatprep.subr.mxu0 0.0
  %650 = vmatpush1.msra.mxu0 0.0
  %651 = vmatprep.subr.mxu0 0.0
  %652 = vmatpush1.msra.mxu0 0.0
  %653 = vmatprep.subr.mxu0 0.0
  %654 = vmatpush1.msra.mxu0 0.0
  %655 = vmatprep.subr.mxu0 0.0
  %656 = vmatpush1.msra.mxu0 0.0
  %657 = vmatprep.subr.mxu0 0.0
  %658 = vmatpush1.msra.mxu0 0.0
  %659 = vmatprep.subr.mxu0 0.0
  %660 = vmatpush1.msra.mxu0 0.0
  %661 = vmatprep.subr.mxu0 0.0
  %662 = vmatpush1.msra.mxu0 0.0
  %663 = vmatprep.subr.mxu0 0.0
  %664 = vmatpush1.msra.mxu0 0.0
  %665 = vmatprep.subr.mxu0 0.0
  %666 = vmatpush1.msra.mxu0 0.0
  %667 = vmatprep.subr.mxu0 0.0
  %668 = vmatpush1.msra.mxu0 0.0
  %669 = vmatprep.subr.mxu0 0.0
  %670 = vmatpush1.msra.mxu0 0.0
  %671 = vmatprep.subr.mxu0 0.0
  %672 = vmatpush1.msra.mxu0 0.0
  %673 = vmatprep.subr.mxu0 0.0
  %674 = vmatpush1.msra.mxu0 0.0
  %675 = vmatprep.subr.mxu0 0.0
  %676 = vmatpush1.msra.mxu0 0.0
  %677 = vmatprep.subr.mxu0 0.0
  %678 = vmatpush1.msra.mxu0 0.0
  %679 = vmatprep.subr.mxu0 0.0
  %680 = vmatpush1.msra.mxu0 0.0
  %681 = vmatprep.subr.mxu0 0.0
  %682 = vmatpush1.msra.mxu0 0.0
  %683 = vmatprep.subr.mxu0 0.0
  %684 = vmatpush1.msra.mxu0 0.0
  %685 = vmatprep.subr.mxu0 0.0
  %686 = vmatpush1.msra.mxu0 0.0
  %687 = vmatprep.subr.mxu0 0.0
  %688 = vmatpush1.msra.mxu0 0.0
  %689 = vmatprep.subr.mxu0 0.0
  %690 = vmatpush1.msra.mxu0 0.0
  %691 = vmatprep.subr.mxu0 0.0
  %692 = vmatpush1.msra.mxu0 0.0
  %693 = vmatprep.subr.mxu0 0.0
  %694 = vmatpush1.msra.mxu0 0.0
  %695 = vmatprep.subr.mxu0 0.0
  %696 = vmatpush1.msra.mxu0 0.0
  %697 = vmatprep.subr.mxu0 0.0
  %698 = vmatpush1.msra.mxu0 0.0
  %699 = vmatprep.subr.mxu0 0.0
  %700 = vmatpush1.msra.mxu0 0.0
  %701 = vmatprep.subr.mxu0 0.0
  %702 = vmatpush1.msra.mxu0 0.0
  %703 = vmatprep.subr.mxu0 0.0
  %704 = vmatpush1.msra.mxu0 0.0
  %705 = vmatprep.subr.mxu0 0.0
  %706 = vmatpush1.msra.mxu0 0.0
  %707 = vmatprep.subr.mxu0 0.0
  %708 = vmatpush1.msra.mxu0 0.0
  %709 = vmatprep.subr.mxu0 0.0
  %710 = vmatpush1.msra.mxu0 0.0
  %711 = vmatprep.mubr.f32.mxu0 0.0
  %712 = vmatmul.mubr.f32.gmra.mrb[0].mxu0 %v645
  %v713 = vpop.f32.mrb[0].mxu0
  %v714 = vadd.f32 0.0, %v713
  %v715 = vpop.f32.mrb[0].mxu0
  %716 = vdwg.mxu0
  %v717 = vadd.f32 %v643, %v714
  %v718 = vtanh.pop %v717
  %719 = vst.msk [vmem:[%s642] sm:$0x3] %vm406, %v718
  %s720 = scalar_lea.vmem [#allocation2], 10
  %v721 = vld [vmem:[%s720] sm:$0x3]
  %v723 = vsel %vm41, %v718, 0
  %725 = vmatprep.subr.mxu0 0.0
  %726 = vmatpush1.msra.mxu0 %v332
  %727 = vmatprep.subr.mxu0 0.0
  %728 = vmatpush1.msra.mxu0 0.0
  %729 = vmatprep.subr.mxu0 0.0
  %730 = vmatpush1.msra.mxu0 0.0
  %731 = vmatprep.subr.mxu0 0.0
  %732 = vmatpush1.msra.mxu0 0.0
  %733 = vmatprep.subr.mxu0 0.0
  %734 = vmatpush1.msra.mxu0 0.0
  %735 = vmatprep.subr.mxu0 0.0
  %736 = vmatpush1.msra.mxu0 0.0
  %737 = vmatprep.subr.mxu0 0.0
  %738 = vmatpush1.msra.mxu0 0.0
  %739 = vmatprep.subr.mxu0 0.0
  %740 = vmatpush1.msra.mxu0 0.0
  %741 = vmatprep.subr.mxu0 0.0
  %742 = vmatpush1.msra.mxu0 0.0
  %743 = vmatprep.subr.mxu0 0.0
  %744 = vmatpush1.msra.mxu0 0.0
  %745 = vmatprep.subr.mxu0 0.0
  %746 = vmatpush1.msra.mxu0 0.0
  %747 = vmatprep.subr.mxu0 0.0
  %748 = vmatpush1.msra.mxu0 0.0
  %749 = vmatprep.subr.mxu0 0.0
  %750 = vmatpush1.msra.mxu0 0.0
  %751 = vmatprep.subr.mxu0 0.0
  %752 = vmatpush1.msra.mxu0 0.0
  %753 = vmatprep.subr.mxu0 0.0
  %754 = vmatpush1.msra.mxu0 0.0
  %755 = vmatprep.subr.mxu0 0.0
  %756 = vmatpush1.msra.mxu0 0.0
  %757 = vmatprep.subr.mxu0 0.0
  %758 = vmatpush1.msra.mxu0 0.0
  %759 = vmatprep.subr.mxu0 0.0
  %760 = vmatpush1.msra.mxu0 0.0
  %761 = vmatprep.subr.mxu0 0.0
  %762 = vmatpush1.msra.mxu0 0.0
  %763 = vmatprep.subr.mxu0 0.0
  %764 = vmatpush1.msra.mxu0 0.0
  %765 = vmatprep.subr.mxu0 0.0
  %766 = vmatpush1.msra.mxu0 0.0
  %767 = vmatprep.subr.mxu0 0.0
  %768 = vmatpush1.msra.mxu0 0.0
  %769 = vmatprep.subr.mxu0 0.0
  %770 = vmatpush1.msra.mxu0 0.0
  %771 = vmatprep.subr.mxu0 0.0
  %772 = vmatpush1.msra.mxu0 0.0
  %773 = vmatprep.subr.mxu0 0.0
  %774 = vmatpush1.msra.mxu0 0.0
  %775 = vmatprep.subr.mxu0 0.0
  %776 = vmatpush1.msra.mxu0 0.0
  %777 = vmatprep.subr.mxu0 0.0
  %778 = vmatpush1.msra.mxu0 0.0
  %779 = vmatprep.subr.mxu0 0.0
  %780 = vmatpush1.msra.mxu0 0.0
  %781 = vmatprep.subr.mxu0 0.0
  %782 = vmatpush1.msra.mxu0 0.0
  %783 = vmatprep.subr.mxu0 0.0
  %784 = vmatpush1.msra.mxu0 0.0
  %785 = vmatprep.subr.mxu0 0.0
  %786 = vmatpush1.msra.mxu0 0.0
  %787 = vmatprep.subr.mxu0 0.0
  %788 = vmatpush1.msra.mxu0 0.0
  %789 = vmatprep.mubr.f32.mxu0 0.0
  %790 = vmatmul.mubr.f32.gmra.mrb[0].mxu0 %v723
  %v791 = vpop.f32.mrb[0].mxu0
  %v792 = vadd.f32 0.0, %v791
  %v793 = vpop.f32.mrb[0].mxu0
  %794 = vdwg.mxu0
  %v795 = vadd.f32 %v721, %v792
  %v796 = vtanh.pop %v795
  %797 = vst.msk [vmem:[%s720] sm:$0x3] %vm406, %v796
  %s798 = scalar_lea.vmem [#allocation2], 12
  %v799 = vld [vmem:[%s798] sm:$0x3]
  %v801 = vsel %vm41, %v796, 0
  %803 = vmatprep.subr.mxu0 0.0
  %804 = vmatpush1.msra.mxu0 %v332
  %805 = vmatprep.subr.mxu0 0.0
  %806 = vmatpush1.msra.mxu0 0.0
  %807 = vmatprep.subr.mxu0 0.0
  %808 = vmatpush1.msra.mxu0 0.0
  %809 = vmatprep.subr.mxu0 0.0
  %810 = vmatpush1.msra.mxu0 0.0
  %811 = vmatprep.subr.mxu0 0.0
  %812 = vmatpush1.msra.mxu0 0.0
  %813 = vmatprep.subr.mxu0 0.0
  %814 = vmatpush1.msra.mxu0 0.0
  %815 = vmatprep.subr.mxu0 0.0
  %816 = vmatpush1.msra.mxu0 0.0
  %817 = vmatprep.subr.mxu0 0.0
  %818 = vmatpush1.msra.mxu0 0.0
  %819 = vmatprep.subr.mxu0 0.0
  %820 = vmatpush1.msra.mxu0 0.0
  %821 = vmatprep.subr.mxu0 0.0
  %822 = vmatpush1.msra.mxu0 0.0
  %823 = vmatprep.subr.mxu0 0.0
  %824 = vmatpush1.msra.mxu0 0.0
  %825 = vmatprep.subr.mxu0 0.0
  %826 = vmatpush1.msra.mxu0 0.0
  %827 = vmatprep.subr.mxu0 0.0
  %828 = vmatpush1.msra.mxu0 0.0
  %829 = vmatprep.subr.mxu0 0.0
  %830 = vmatpush1.msra.mxu0 0.0
  %831 = vmatprep.subr.mxu0 0.0
  %832 = vmatpush1.msra.mxu0 0.0
  %833 = vmatprep.subr.mxu0 0.0
  %834 = vmatpush1.msra.mxu0 0.0
  %835 = vmatprep.subr.mxu0 0.0
  %836 = vmatpush1.msra.mxu0 0.0
  %837 = vmatprep.subr.mxu0 0.0
  %838 = vmatpush1.msra.mxu0 0.0
  %839 = vmatprep.subr.mxu0 0.0
  %840 = vmatpush1.msra.mxu0 0.0
  %841 = vmatprep.subr.mxu0 0.0
  %842 = vmatpush1.msra.mxu0 0.0
  %843 = vmatprep.subr.mxu0 0.0
  %844 = vmatpush1.msra.mxu0 0.0
  %845 = vmatprep.subr.mxu0 0.0
  %846 = vmatpush1.msra.mxu0 0.0
  %847 = vmatprep.subr.mxu0 0.0
  %848 = vmatpush1.msra.mxu0 0.0
  %849 = vmatprep.subr.mxu0 0.0
  %850 = vmatpush1.msra.mxu0 0.0
  %851 = vmatprep.subr.mxu0 0.0
  %852 = vmatpush1.msra.mxu0 0.0
  %853 = vmatprep.subr.mxu0 0.0
  %854 = vmatpush1.msra.mxu0 0.0
  %855 = vmatprep.subr.mxu0 0.0
  %856 = vmatpush1.msra.mxu0 0.0
  %857 = vmatprep.subr.mxu0 0.0
  %858 = vmatpush1.msra.mxu0 0.0
  %859 = vmatprep.subr.mxu0 0.0
  %860 = vmatpush1.msra.mxu0 0.0
  %861 = vmatprep.subr.mxu0 0.0
  %862 = vmatpush1.msra.mxu0 0.0
  %863 = vmatprep.subr.mxu0 0.0
  %864 = vmatpush1.msra.mxu0 0.0
  %865 = vmatprep.subr.mxu0 0.0
  %866 = vmatpush1.msra.mxu0 0.0
  %867 = vmatprep.mubr.f32.mxu0 0.0
  %868 = vmatmul.mubr.f32.gmra.mrb[0].mxu0 %v801
  %v869 = vpop.f32.mrb[0].mxu0
  %v870 = vadd.f32 0.0, %v869
  %v871 = vpop.f32.mrb[0].mxu0
  %872 = vdwg.mxu0
  %v873 = vadd.f32 %v799, %v870
  %v874 = vtanh.pop %v873
  %875 = vst.msk [vmem:[%s798] sm:$0x3] %vm406, %v874
  %s876 = scalar_lea.vmem [#allocation2], 14
  %v877 = vld [vmem:[%s876] sm:$0x3]
  %v879 = vsel %vm41, %v874, 0
  %881 = vmatprep.subr.mxu0 0.0
  %882 = vmatpush1.msra.mxu0 %v332
  %883 = vmatprep.subr.mxu0 0.0
  %884 = vmatpush1.msra.mxu0 0.0
  %885 = vmatprep.subr.mxu0 0.0
  %886 = vmatpush1.msra.mxu0 0.0
  %887 = vmatprep.subr.mxu0 0.0
  %888 = vmatpush1.msra.mxu0 0.0
  %889 = vmatprep.subr.mxu0 0.0
  %890 = vmatpush1.msra.mxu0 0.0
  %891 = vmatprep.subr.mxu0 0.0
  %892 = vmatpush1.msra.mxu0 0.0
  %893 = vmatprep.subr.mxu0 0.0
  %894 = vmatpush1.msra.mxu0 0.0
  %895 = vmatprep.subr.mxu0 0.0
  %896 = vmatpush1.msra.mxu0 0.0
  %897 = vmatprep.subr.mxu0 0.0
  %898 = vmatpush1.msra.mxu0 0.0
  %899 = vmatprep.subr.mxu0 0.0
  %900 = vmatpush1.msra.mxu0 0.0
  %901 = vmatprep.subr.mxu0 0.0
  %902 = vmatpush1.msra.mxu0 0.0
  %903 = vmatprep.subr.mxu0 0.0
  %904 = vmatpush1.msra.mxu0 0.0
  %905 = vmatprep.subr.mxu0 0.0
  %906 = vmatpush1.msra.mxu0 0.0
  %907 = vmatprep.subr.mxu0 0.0
  %908 = vmatpush1.msra.mxu0 0.0
  %909 = vmatprep.subr.mxu0 0.0
  %910 = vmatpush1.msra.mxu0 0.0
  %911 = vmatprep.subr.mxu0 0.0
  %912 = vmatpush1.msra.mxu0 0.0
  %913 = vmatprep.subr.mxu0 0.0
  %914 = vmatpush1.msra.mxu0 0.0
  %915 = vmatprep.subr.mxu0 0.0
  %916 = vmatpush1.msra.mxu0 0.0
  %917 = vmatprep.subr.mxu0 0.0
  %918 = vmatpush1.msra.mxu0 0.0
  %919 = vmatprep.subr.mxu0 0.0
  %920 = vmatpush1.msra.mxu0 0.0
  %921 = vmatprep.subr.mxu0 0.0
  %922 = vmatpush1.msra.mxu0 0.0
  %923 = vmatprep.subr.mxu0 0.0
  %924 = vmatpush1.msra.mxu0 0.0
  %925 = vmatprep.subr.mxu0 0.0
  %926 = vmatpush1.msra.mxu0 0.0
  %927 = vmatprep.subr.mxu0 0.0
  %928 = vmatpush1.msra.mxu0 0.0
  %929 = vmatprep.subr.mxu0 0.0
  %930 = vmatpush1.msra.mxu0 0.0
  %931 = vmatprep.subr.mxu0 0.0
  %932 = vmatpush1.msra.mxu0 0.0
  %933 = vmatprep.subr.mxu0 0.0
  %934 = vmatpush1.msra.mxu0 0.0
  %935 = vmatprep.subr.mxu0 0.0
  %936 = vmatpush1.msra.mxu0 0.0
  %937 = vmatprep.subr.mxu0 0.0
  %938 = vmatpush1.msra.mxu0 0.0
  %939 = vmatprep.subr.mxu0 0.0
  %940 = vmatpush1.msra.mxu0 0.0
  %941 = vmatprep.subr.mxu0 0.0
  %942 = vmatpush1.msra.mxu0 0.0
  %943 = vmatprep.subr.mxu0 0.0
  %944 = vmatpush1.msra.mxu0 0.0
  %945 = vmatprep.mubr.f32.mxu0 0.0
  %946 = vmatmul.mubr.f32.gmra.mrb[0].mxu0 %v879
  %v947 = vpop.f32.mrb[0].mxu0
  %v948 = vadd.f32 0.0, %v947
  %v949 = vpop.f32.mrb[0].mxu0
  %950 = vdwg.mxu0
  %v951 = vadd.f32 %v877, %v948
  %v952 = vtanh.pop %v951
  %953 = vst.msk [vmem:[%s876] sm:$0x3] %vm406, %v952
  %v954 = vld [vmem:[#allocation2] sm:$0x1]
  %v955 = vld [vmem:[#allocation2 + $0x2] sm:$0x1]
  %v956 = vld [vmem:[#allocation2 + $0x4] sm:$0x1]
  %v957 = vld [vmem:[#allocation2 + $0x6] sm:$0x1]
  %v958 = vld [vmem:[#allocation2 + $0x8] sm:$0x1]
  %v959 = vld [vmem:[#allocation2 + $0xa] sm:$0x1]
  %v960 = vld [vmem:[#allocation2 + $0xc] sm:$0x1]
  %v961 = vld [vmem:[#allocation2 + $0xe] sm:$0x1]
  %v970 = vrot.slane %v955, 7
  %vm971 = vcmask 1041409
  %v972 = vsel %vm971, %v970, %v954
  %v973 = vrot.slane %v956, 6
  %vm974 = vcmask 1042434
  %v975 = vsel %vm974, %v973, %v972
  %v976 = vrot.slane %v957, 5
  %vm977 = vcmask 1043459
  %v978 = vsel %vm977, %v976, %v975
  %v979 = vrot.slane %v958, 4
  %vm980 = vcmask 1044484
  %v981 = vsel %vm980, %v979, %v978
  %v982 = vrot.slane %v959, 3
  %vm983 = vcmask 1045509
  %v984 = vsel %vm983, %v982, %v981
  %v985 = vrot.slane %v960, 2
  %vm986 = vcmask 1046534
  %v987 = vsel %vm986, %v985, %v984
  %v988 = vrot.slane %v961, 1
  %vm989 = vcmask 1047559
  %v990 = vsel %vm989, %v988, %v987
  %v991 = vsel %vm41, %v990, 0
  %v994 = vsel %vm45, %v25, 0
  %996 = vmatprep.subr.mxu0 0.0
  %997 = vmatpush1.msra.mxu0 %v994
  %998 = vmatprep.subr.mxu0 0.0
  %999 = vmatpush1.msra.mxu0 0.0
  %1000 = vmatprep.subr.mxu0 0.0
  %1001 = vmatpush1.msra.mxu0 0.0
  %1002 = vmatprep.subr.mxu0 0.0
  %1003 = vmatpush1.msra.mxu0 0.0
  %1004 = vmatprep.subr.mxu0 0.0
  %1005 = vmatpush1.msra.mxu0 0.0
  %1006 = vmatprep.subr.mxu0 0.0
  %1007 = vmatpush1.msra.mxu0 0.0
  %1008 = vmatprep.subr.mxu0 0.0
  %1009 = vmatpush1.msra.mxu0 0.0
  %1010 = vmatprep.subr.mxu0 0.0
  %1011 = vmatpush1.msra.mxu0 0.0
  %1012 = vmatprep.subr.mxu0 0.0
  %1013 = vmatpush1.msra.mxu0 0.0
  %1014 = vmatprep.subr.mxu0 0.0
  %1015 = vmatpush1.msra.mxu0 0.0
  %1016 = vmatprep.subr.mxu0 0.0
  %1017 = vmatpush1.msra.mxu0 0.0
  %1018 = vmatprep.subr.mxu0 0.0
  %1019 = vmatpush1.msra.mxu0 0.0
  %1020 = vmatprep.subr.mxu0 0.0
  %1021 = vmatpush1.msra.mxu0 0.0
  %1022 = vmatprep.subr.mxu0 0.0
  %1023 = vmatpush1.msra.mxu0 0.0
  %1024 = vmatprep.subr.mxu0 0.0
  %1025 = vmatpush1.msra.mxu0 0.0
  %1026 = vmatprep.subr.mxu0 0.0
  %1027 = vmatpush1.msra.mxu0 0.0
  %1028 = vmatprep.subr.mxu0 0.0
  %1029 = vmatpush1.msra.mxu0 0.0
  %1030 = vmatprep.subr.mxu0 0.0
  %1031 = vmatpush1.msra.mxu0 0.0
  %1032 = vmatprep.subr.mxu0 0.0
  %1033 = vmatpush1.msra.mxu0 0.0
  %1034 = vmatprep.subr.mxu0 0.0
  %1035 = vmatpush1.msra.mxu0 0.0
  %1036 = vmatprep.subr.mxu0 0.0
  %1037 = vmatpush1.msra.mxu0 0.0
  %1038 = vmatprep.subr.mxu0 0.0
  %1039 = vmatpush1.msra.mxu0 0.0
  %1040 = vmatprep.subr.mxu0 0.0
  %1041 = vmatpush1.msra.mxu0 0.0
  %1042 = vmatprep.subr.mxu0 0.0
  %1043 = vmatpush1.msra.mxu0 0.0
  %1044 = vmatprep.subr.mxu0 0.0
  %1045 = vmatpush1.msra.mxu0 0.0
  %1046 = vmatprep.subr.mxu0 0.0
  %1047 = vmatpush1.msra.mxu0 0.0
  %1048 = vmatprep.subr.mxu0 0.0
  %1049 = vmatpush1.msra.mxu0 0.0
  %1050 = vmatprep.subr.mxu0 0.0
  %1051 = vmatpush1.msra.mxu0 0.0
  %1052 = vmatprep.subr.mxu0 0.0
  %1053 = vmatpush1.msra.mxu0 0.0
  %1054 = vmatprep.subr.mxu0 0.0
  %1055 = vmatpush1.msra.mxu0 0.0
  %1056 = vmatprep.subr.mxu0 0.0
  %1057 = vmatpush1.msra.mxu0 0.0
  %1058 = vmatprep.subr.mxu0 0.0
  %1059 = vmatpush1.msra.mxu0 0.0
  %1060 = vmatprep.mubr.f32.mxu0 0.0
  %1061 = vmatmul.mubr.f32.gmra.mrb[0].mxu0 %v991
  %v1062 = vpop.f32.mrb[0].mxu0
  %v1063 = vadd.f32 %v38, %v1062
  %v1064 = vpop.f32.mrb[0].mxu0
  %1065 = vdwg.mxu0
  %1066 = vst.msk [vmem:[%s6] sm:$0xff] %vm41, %v1063
  %v1067 = vld [vmem:[#allocation2 + $0x1] sm:$0x1]
  %v1068 = vld [vmem:[#allocation2 + $0x3] sm:$0x1]
  %v1069 = vld [vmem:[#allocation2 + $0x5] sm:$0x1]
  %v1070 = vld [vmem:[#allocation2 + $0x7] sm:$0x1]
  %v1071 = vld [vmem:[#allocation2 + $0x9] sm:$0x1]
  %v1072 = vld [vmem:[#allocation2 + $0xb] sm:$0x1]
  %v1073 = vld [vmem:[#allocation2 + $0xd] sm:$0x1]
  %v1074 = vld [vmem:[#allocation2 + $0xf] sm:$0x1]
  %v1083 = vrot.slane %v1068, 7
  %v1084 = vsel %vm971, %v1083, %v1067
  %v1085 = vrot.slane %v1069, 6
  %v1086 = vsel %vm974, %v1085, %v1084
  %v1087 = vrot.slane %v1070, 5
  %v1088 = vsel %vm977, %v1087, %v1086
  %v1089 = vrot.slane %v1071, 4
  %v1090 = vsel %vm980, %v1089, %v1088
  %v1091 = vrot.slane %v1072, 3
  %v1092 = vsel %vm983, %v1091, %v1090
  %v1093 = vrot.slane %v1073, 2
  %v1094 = vsel %vm986, %v1093, %v1092
  %v1095 = vrot.slane %v1074, 1
  %v1096 = vsel %vm989, %v1095, %v1094
  %v1097 = vsel %vm41, %v1096, 0
  %1099 = vmatprep.subr.mxu0 0.0
  %1100 = vmatpush1.msra.mxu0 %v994
  %1101 = vmatprep.subr.mxu0 0.0
  %1102 = vmatpush1.msra.mxu0 0.0
  %1103 = vmatprep.subr.mxu0 0.0
  %1104 = vmatpush1.msra.mxu0 0.0
  %1105 = vmatprep.subr.mxu0 0.0
  %1106 = vmatpush1.msra.mxu0 0.0
  %1107 = vmatprep.subr.mxu0 0.0
  %1108 = vmatpush1.msra.mxu0 0.0
  %1109 = vmatprep.subr.mxu0 0.0
  %1110 = vmatpush1.msra.mxu0 0.0
  %1111 = vmatprep.subr.mxu0 0.0
  %1112 = vmatpush1.msra.mxu0 0.0
  %1113 = vmatprep.subr.mxu0 0.0
  %1114 = vmatpush1.msra.mxu0 0.0
  %1115 = vmatprep.subr.mxu0 0.0
  %1116 = vmatpush1.msra.mxu0 0.0
  %1117 = vmatprep.subr.mxu0 0.0
  %1118 = vmatpush1.msra.mxu0 0.0
  %1119 = vmatprep.subr.mxu0 0.0
  %1120 = vmatpush1.msra.mxu0 0.0
  %1121 = vmatprep.subr.mxu0 0.0
  %1122 = vmatpush1.msra.mxu0 0.0
  %1123 = vmatprep.subr.mxu0 0.0
  %1124 = vmatpush1.msra.mxu0 0.0
  %1125 = vmatprep.subr.mxu0 0.0
  %1126 = vmatpush1.msra.mxu0 0.0
  %1127 = vmatprep.subr.mxu0 0.0
  %1128 = vmatpush1.msra.mxu0 0.0
  %1129 = vmatprep.subr.mxu0 0.0
  %1130 = vmatpush1.msra.mxu0 0.0
  %1131 = vmatprep.subr.mxu0 0.0
  %1132 = vmatpush1.msra.mxu0 0.0
  %1133 = vmatprep.subr.mxu0 0.0
  %1134 = vmatpush1.msra.mxu0 0.0
  %1135 = vmatprep.subr.mxu0 0.0
  %1136 = vmatpush1.msra.mxu0 0.0
  %1137 = vmatprep.subr.mxu0 0.0
  %1138 = vmatpush1.msra.mxu0 0.0
  %1139 = vmatprep.subr.mxu0 0.0
  %1140 = vmatpush1.msra.mxu0 0.0
  %1141 = vmatprep.subr.mxu0 0.0
  %1142 = vmatpush1.msra.mxu0 0.0
  %1143 = vmatprep.subr.mxu0 0.0
  %1144 = vmatpush1.msra.mxu0 0.0
  %1145 = vmatprep.subr.mxu0 0.0
  %1146 = vmatpush1.msra.mxu0 0.0
  %1147 = vmatprep.subr.mxu0 0.0
  %1148 = vmatpush1.msra.mxu0 0.0
  %1149 = vmatprep.subr.mxu0 0.0
  %1150 = vmatpush1.msra.mxu0 0.0
  %1151 = vmatprep.subr.mxu0 0.0
  %1152 = vmatpush1.msra.mxu0 0.0
  %1153 = vmatprep.subr.mxu0 0.0
  %1154 = vmatpush1.msra.mxu0 0.0
  %1155 = vmatprep.subr.mxu0 0.0
  %1156 = vmatpush1.msra.mxu0 0.0
  %1157 = vmatprep.subr.mxu0 0.0
  %1158 = vmatpush1.msra.mxu0 0.0
  %1159 = vmatprep.subr.mxu0 0.0
  %1160 = vmatpush1.msra.mxu0 0.0
  %1161 = vmatprep.subr.mxu0 0.0
  %1162 = vmatpush1.msra.mxu0 0.0
  %1163 = vmatprep.mubr.f32.mxu0 0.0
  %1164 = vmatmul.mubr.f32.gmra.mrb[0].mxu0 %v1097
  %v1165 = vpop.f32.mrb[0].mxu0
  %v1166 = vadd.f32 %v38, %v1165
  %v1167 = vpop.f32.mrb[0].mxu0
  %1168 = vdwg.mxu0
  %s1169 = scalar_lea.vmem %s6, 8
  %1170 = vst.msk [vmem:[%s1169] sm:$0xff] %vm41, %v1166
  // Predicated region
  $region26: #{tpu_custom_call.1} parent=0 // pred_check
    _
  $region27: #{tpu_custom_call.1} parent=0 // pred_check_branch
    %1172 = sbr.rel (0) target = $region29
  $region28: #{tpu_custom_call.1} parent=0 // pred_region
    _
  $region29: #{tpu_custom_call.1} parent=0 // pred_fallthru
    _
  // Predicated region
  $region30: #{tpu_custom_call.1} parent=0 // pred_check
    _
  $region31: #{tpu_custom_call.1} parent=0 // pred_check_branch
    %1174 = sbr.rel (0) target = $region33
  $region32: #{tpu_custom_call.1} parent=0 // pred_region
    _
  $region33: #{tpu_custom_call.1} parent=0 // pred_fallthru
    _

</llo_original>
